<compile_context>
chip_gen: v7x
topology: tpu7x:2x2x1
jax: 0.10.0
libtpu: 0.0.40
codegen_flags: <defaults>
</compile_context>

<pallas_src>
import jax
import jax.numpy as jnp
from jax.experimental import pallas as pl
from jax.experimental.pallas import tpu as pltpu


def _copy_kernel(x_ref, o_ref):
    # Both refs are (wf*C, tile_ho, Wo); the whole shuffle is in the index_maps.
    o_ref[...] = x_ref[...]


def _vmem_capacity_bytes():
    try:
        return int(pltpu.get_tpu_info().vmem_capacity_bytes)
    except Exception:
        return 128 * 1024 * 1024  # v5e/v6e default if the query is unavailable


def space_to_depth(x_nchw, h_factor=2, w_factor=2):
    N, C, H, W = x_nchw.shape
    hf, wf = h_factor, w_factor
    assert H % hf == 0 and W % wf == 0
    Ho, Wo = H // hf, W // wf
    wfC = wf * C
    Cout = hf * wfC
    itemsize = jnp.dtype(x_nchw.dtype).itemsize

    # ---- Pass 1 (XLA): W-deinterleave + (wf, C) channel grouping -----------
    # (N,C,H,W) -> free view (N,C,Ho,hf,Wo,wf) -> transpose (0,5,1,3,2,4)
    #   -> (N, wf, C, hf, Ho, Wo) -> free merge (wf,C) -> (N, wf*C, hf, Ho, Wo)
    # so x_r[n, j*C+c, i, ho, wo] = x[n, c, ho*hf+i, wo*wf+j].
    x_r = jnp.transpose(x_nchw.reshape(N, C, Ho, hf, Wo, wf), (0, 5, 1, 3, 2, 4))
    x_r = x_r.reshape(N, wfC, hf, Ho, Wo)

    # ---- Generation-aware VMEM budget / tile sizing -------------------------
    vmem_cap = _vmem_capacity_bytes()                    # 64 MiB v7x, 128 MiB v5e/v6e
    vmem_limit = min(vmem_cap // 2, 100 * 1024 * 1024)   # explicit scoped limit
    # 2 operands x 2 pipeline buffers = 4 live blocks; keep them ~half the limit.
    block_target = min(vmem_limit // 8, 8 * 1024 * 1024)

    row_bytes = wfC * Wo * itemsize                      # bytes per Ho-row of a block
    max_rows = max(1, block_target // max(row_bytes, 1))
    if max_rows >= Ho:
        tile_ho = Ho                                      # full dim -> always legal
    else:
        tile_ho = min(Ho, max(8, (max_rows // 8) * 8))    # multiple of 8
    n_t = pl.cdiv(Ho, tile_ho)

    # v7x has 2 TensorCores: make sure the parallel grid has >= 2 steps.
    if N * hf * n_t < 2 and Ho >= 16:
        tile_ho = max(8, ((Ho // 2) // 8) * 8)
        n_t = pl.cdiv(Ho, tile_ho)

    # ---- Pass 2 (Pallas): pure copy; hf-hoist via index_maps ---------------
    out5 = pl.pallas_call(
        _copy_kernel,
        out_shape=jax.ShapeDtypeStruct((N, hf, wfC, Ho, Wo), x_nchw.dtype),
        grid=(N, hf, n_t),
        in_specs=[
            pl.BlockSpec((None, wfC, None, tile_ho, Wo),
                         lambda n, i, t: (n, 0, i, t, 0)),
        ],
        out_specs=pl.BlockSpec((None, None, wfC, tile_ho, Wo),
                               lambda n, i, t: (n, i, 0, t, 0)),
        compiler_params=pltpu.CompilerParams(
            dimension_semantics=("parallel", "parallel", "parallel"),
            vmem_limit_bytes=vmem_limit),
    )(x_r)

    # Free row-major view: (N, hf, wf*C, Ho, Wo) == (N, hf*wf*C, Ho, Wo) with
    # channel index i*wf*C + j*C + c, exactly matching inv_pixelShuffle.
    return out5.reshape(N, Cout, Ho, Wo)


def _reference(x, hf=2, wf=2):
    """Pure-JAX port of inv_pixelShuffle for correctness checking."""
    N, C, H, W = x.shape
    x = x.reshape(N, C, H // hf, hf, W // wf, wf)
    x = jnp.transpose(x, (0, 3, 5, 1, 2, 4))
    return x.reshape(N, C * hf * wf, H // hf, W // wf)


if __name__ == "__main__":
    key = jax.random.PRNGKey(0)

    # Primary check: matches the module's expected small shape.
    x = jax.random.normal(key, (2, 4, 16, 16), dtype=jnp.float32)
    out = jax.block_until_ready(space_to_depth(x, 2, 2))
    ref = _reference(x, 2, 2)
    assert out.shape == (2, 16, 8, 8), out.shape
    assert out.dtype == x.dtype
    assert jnp.array_equal(out, ref), "mismatch vs reference inv_pixelShuffle"

    # Secondary checks: different factors / shapes (still tiny).
    k1, k2 = jax.random.split(key)
    x2 = jax.random.normal(k1, (1, 8, 32, 16), dtype=jnp.float32)
    out2 = jax.block_until_ready(space_to_depth(x2, 2, 2))
    assert jnp.array_equal(out2, _reference(x2, 2, 2)), "mismatch (1,8,32,16)"

    x3 = jax.random.normal(k2, (1, 4, 32, 32), dtype=jnp.float32)
    out3 = jax.block_until_ready(space_to_depth(x3, 4, 2))
    assert jnp.array_equal(out3, _reference(x3, 4, 2)), "mismatch hf=4,wf=2"

    print("KERNEL_OK")
</pallas_src>

<mosaic_0001>
module attributes {stable_mosaic.version = 11 : i64} {
  func.func @_copy_kernel(%arg0: i32, %arg1: i32, %arg2: i32, %arg3: memref<1x8x1x8x8xf32, #tpu.memory_space<vmem>>, %arg4: memref<1x1x8x8x8xf32, #tpu.memory_space<vmem>>) attributes {dimension_semantics = [#tpu.dimension_semantics<parallel>, #tpu.dimension_semantics<parallel>, #tpu.dimension_semantics<parallel>], iteration_bounds = array<i64: 2, 2, 1>, scalar_prefetch = 0 : i64, scratch_operands = 0 : i64, tpu.core_type = #tpu.core_type<tc>, window_params = [{transform_indices = @transform_0, window_bounds = array<i64: 1, 8, 1, 8, 8>}, {transform_indices = @transform_1, window_bounds = array<i64: 1, 1, 8, 8, 8>}]} {
    %c0 = arith.constant 0 : index
    %c0_0 = arith.constant 0 : index
    %c0_1 = arith.constant 0 : index
    %c0_2 = arith.constant 0 : index
    %c0_3 = arith.constant 0 : index
    %0 = vector.load %arg3[%c0, %c0_0, %c0_1, %c0_2, %c0_3] : memref<1x8x1x8x8xf32, #tpu.memory_space<vmem>>, vector<1x8x1x8x8xf32>
    %1 = vector.shape_cast %0 : vector<1x8x1x8x8xf32> to vector<8x8x8xf32>
    %c0_4 = arith.constant 0 : index
    %c0_5 = arith.constant 0 : index
    %c0_6 = arith.constant 0 : index
    %c0_7 = arith.constant 0 : index
    %c0_8 = arith.constant 0 : index
    %2 = vector.load %arg4[%c0_4, %c0_5, %c0_6, %c0_7, %c0_8] : memref<1x1x8x8x8xf32, #tpu.memory_space<vmem>>, vector<1x1x8x8x8xf32>
    %3 = vector.shape_cast %2 : vector<1x1x8x8x8xf32> to vector<8x8x8xf32>
    %4 = vector.shape_cast %1 : vector<8x8x8xf32> to vector<1x1x8x8x8xf32>
    tpu.vector_store %arg4[%c0_4, %c0_5, %c0_6, %c0_7, %c0_8], %4 {strides = array<i32>} : memref<1x1x8x8x8xf32, #tpu.memory_space<vmem>>, vector<1x1x8x8x8xf32>,
    return
  }
  func.func @transform_0(%arg0: i32, %arg1: i32, %arg2: i32) -> (i32, i32, i32, i32, i32) {
    %c0_i32 = arith.constant 0 : i32
    %c0_i32_0 = arith.constant 0 : i32
    %c0_i32_1 = arith.constant 0 : i32
    return %arg0, %c0_i32, %arg1, %arg2, %c0_i32_0 : i32, i32, i32, i32, i32
  }
  func.func @transform_1(%arg0: i32, %arg1: i32, %arg2: i32) -> (i32, i32, i32, i32, i32) {
    %c0_i32 = arith.constant 0 : i32
    %c0_i32_0 = arith.constant 0 : i32
    %c0_i32_1 = arith.constant 0 : i32
    return %arg0, %arg1, %c0_i32, %arg2, %c0_i32_0 : i32, i32, i32, i32, i32
  }
}

</mosaic_0001>

<llo_original>
// kernel: tpu_custom_call.1
$region0: #{tpu_custom_call.1}
  #allocation0 [shape = 'u32[]', space=smem, size = 0x4, offset = 0x4, fixed_abs, tag = 'smem constant byte address 0x4 - core index']
  #allocation1 [shape = 'u32[144,128]{1,0:T(1,128)}', space=vmem, size = 0x12000, scoped, tag = 'internal scratch']
  %s0 = inlined_call_operand.hbm [shape: f32[2,8,2,8,8], index: 0, kind: input, shape index: {}]
  %s1 = inlined_call_operand.hbm [shape: f32[2,2,8,8,8], index: 1, kind: output, shape index: {}]
  %s2 = sld [smem:[#allocation0]]
  $region41: #{tpu_custom_call.1} parent=0
    _
  %s4 = ssub.s32 1, %s2
  %s5 = scalar_select 0, %s4, %s2
  $region1: #{tpu_custom_call.1} parent=0
    #allocation2 [shape = 'u8[65536]{0}', space=vmem, size = 0x10000, scoped, tag = 'input window, operand 0']
    #allocation3 [shape = 's32[2]{0}', space=sflag, size = 0x8, scoped, tag = 'scoped memory for tpu_custom_call.1']
    #allocation4 [shape = 's32[2]{0}', space=sflag, size = 0x8, scoped, tag = 'scoped memory for tpu_custom_call.1']
    #allocation5 [shape = 'u8[65536]{0}', space=vmem, size = 0x10000, scoped, tag = 'output window, operand 0']
    %6 = vsyncpa [#allocation3], 0
    %s7 = scalar_lea.sflag [#allocation3], 1
    %8 = vsyncpa %s7, 0
    %9 = vsyncpa [#allocation4], 0
    %s10 = scalar_lea.sflag [#allocation4], 1
    %11 = vsyncpa %s10, 0
    loop: start=0, step=1, limit=6
    $region2: #{tpu_custom_call.1} parent=1 // loop_pre_header
      _
    $region3: #{tpu_custom_call.1} parent=1 // loop_header
      %s13 = sphi 0, %s17
      %p14 = scmp.ge.s32.totalorder %s13, 6
      %s20 = sphi 0, %s39
      %s21 = sphi 0, %s35
      %s22 = sphi 0, %s31
      %s23 = sphi 0, %s20
      %s24 = sphi 0, %s21
      %s25 = sphi 0, %s22
      %s26 = sphi 0, %s23
      %s27 = sphi 0, %s24
      %s28 = sphi 0, %s25
      %s46 = sphi 0, %s48
      %s49 = sphi 0, %s46
      %s50 = sphi 0, %s49
      %s66 = sphi 0, %s50
      %s76 = sphi 0, %s78
      %s79 = sphi 0, %s76
      %s80 = sphi 0, %s79
      %s96 = sphi 0, %s80
    $region4: #{tpu_custom_call.1} parent=1 // loop_header_branch
      %16 = sbr.rel (%p14) target = $region8
    $region5: #{tpu_custom_call.1} parent=1 // loop_body
      %s18 = ssub.s32 %s13, 1
      %s19 = ssub.s32 %s13, 2
      %s29 = sadd.s32 1, %s22
      %p30 = scmp.ge.s32.totalorder %s29, 1
      %s31 = scalar_select %p30, 0, %s29
      %s32 = sadd.s32 1, %s21
      %s33 = scalar_select %p30, %s32, %s21
      %p34 = scmp.ge.s32.totalorder %s33, 2
      %s35 = scalar_select %p34, 0, %s33
      %s36 = sadd.s32 1, %s20
      %s37 = scalar_select %p34, %s36, %s20
      %p38 = scmp.ge.s32.totalorder %s37, 2
      %s39 = scalar_select %p38, 0, %s37
      %s40 = ssub.s32 %s20, %s39
      %s41 = ssub.s32 %s21, %s35
      %s42 = sor.u32 %s40, %s41
      %s43 = ssub.s32 %s22, %s31
      %s44 = sor.u32 %s42, %s43
      %p45 = scmp.eq.s32.totalorder %s44, 0
      %s47 = sadd.s32 %s46, 1
      %s48 = scalar_select %p45, %s46, %s47
      %p51 = pneg %p45
      %p52 = scmp.eq.s32.totalorder %s13, 3
      %p53 = por %p51, %p52
      %p54 = scmp.ne.s32.totalorder %s46, %s49
      %p55 = scmp.eq.s32.totalorder %s13, 0
      %p56 = por %p54, %p55
      %p57 = scmp.ne.s32.totalorder %s46, %s49
      %p58 = scmp.eq.s32.totalorder %s18, 3
      %p59 = por %p57, %p58
      %p60 = scmp.ne.s32.totalorder %s49, %s50
      %p61 = scmp.eq.s32.totalorder %s18, 0
      %p62 = por %p60, %p61
      %p63 = scmp.ne.s32.totalorder %s49, %s50
      %p64 = scmp.eq.s32.totalorder %s19, 3
      %p65 = por %p63, %p64
      %p67 = scmp.ne.s32.totalorder %s50, %s66
      %p68 = scmp.eq.s32.totalorder %s19, 0
      %p69 = por %p67, %p68
      %s70 = ssub.s32 %s20, %s39
      %s71 = ssub.s32 %s21, %s35
      %s72 = sor.u32 %s70, %s71
      %s73 = ssub.s32 %s22, %s31
      %s74 = sor.u32 %s72, %s73
      %p75 = scmp.eq.s32.totalorder %s74, 0
      %s77 = sadd.s32 %s76, 1
      %s78 = scalar_select %p75, %s76, %s77
      %p81 = pneg %p75
      %p82 = scmp.eq.s32.totalorder %s13, 3
      %p83 = por %p81, %p82
      %p84 = scmp.ne.s32.totalorder %s76, %s79
      %p85 = scmp.eq.s32.totalorder %s13, 0
      %p86 = por %p84, %p85
      %p87 = scmp.ne.s32.totalorder %s76, %s79
      %p88 = scmp.eq.s32.totalorder %s18, 3
      %p89 = por %p87, %p88
      %p90 = scmp.ne.s32.totalorder %s79, %s80
      %p91 = scmp.eq.s32.totalorder %s18, 0
      %p92 = por %p90, %p91
      %p93 = scmp.ne.s32.totalorder %s79, %s80
      %p94 = scmp.eq.s32.totalorder %s19, 3
      %p95 = por %p93, %p94
      %p97 = scmp.ne.s32.totalorder %s80, %s96
      %p98 = scmp.eq.s32.totalorder %s19, 0
      %p99 = por %p97, %p98
      %p100 = scmp.le.s32.totalorder 1, %s13
      %p101 = scmp.lt.s32.totalorder %s13, 5
      %p102 = pnand %p100, %p101
      %p103 = pneg %p102
      // Predicated region
      $region9: #{tpu_custom_call.1} parent=5 // pred_check
        _
      $region10: #{tpu_custom_call.1} parent=5 // pred_check_branch
        %105 = sbr.rel (%p102) target = $region12
      $region11: #{tpu_custom_call.1} parent=5 // pred_region
        %s106 = ssub.s32 %s13, 1
      $region12: #{tpu_custom_call.1} parent=5 // pred_fallthru
        _
      %p107 = scmp.lt.s32.totalorder %s13, 4
      // Predicated region
      $region13: #{tpu_custom_call.1} parent=5 // pred_check
        %p108 = pneg %p107
      $region14: #{tpu_custom_call.1} parent=5 // pred_check_branch
        %110 = sbr.rel (%p108) target = $region16
      $region15: #{tpu_custom_call.1} parent=5 // pred_region
        // Predicated region
        $region17: #{tpu_custom_call.1} parent=15 // pred_check
          %p111 = pneg %p56
        $region18: #{tpu_custom_call.1} parent=15 // pred_check_branch
          %113 = sbr.rel (%p111) target = $region20
        $region19: #{tpu_custom_call.1} parent=15 // pred_region
          %s114 = sand.u32 %s46, 1
          %s115 = scalar_lea.sflag [#allocation3], %s114
          %s116 = sand.u32 %s46, 1
          %s117 = smul.addr %s116, 64
          %s118 = scalar_lea.vmem [#allocation2], %s117
          %s120 = ssub.s32 1024, 1024
          %121 = vsyncadd %s115, %s120
          %s122 = sadd.s32 %s22, %s21
          %s123 = smul.addr %s20, 16
          %s124 = sadd.s32 %s122, %s123
          %s125 = smul.addr %s124, 128
          %s126 = scalar_lea.hbm %s0, %s125
          %s127 = sshll.u32 %s118, 4
          %s128 = int_to_ptr.vmem [resolvable:$true] %s127
          %133 = dma.hbm_to_vmem [thread:$0]  %s126, 1024, %s128, %s115, 256, 128, 8
        $region20: #{tpu_custom_call.1} parent=15 // pred_fallthru
          _
      $region16: #{tpu_custom_call.1} parent=5 // pred_fallthru
        _
      %p134 = scmp.le.s32.totalorder 1, %s13
      %p135 = scmp.lt.s32.totalorder %s13, 5
      %p136 = pnand %p134, %p135
      %p137 = pneg %p136
      // Predicated region
      $region21: #{tpu_custom_call.1} parent=5 // pred_check
        _
      $region22: #{tpu_custom_call.1} parent=5 // pred_check_branch
        %139 = sbr.rel (%p136) target = $region24
      $region23: #{tpu_custom_call.1} parent=5 // pred_region
        %s140 = ssub.s32 %s13, 1
        %s141 = sand.u32 %s49, 1
        %s142 = scalar_lea.sflag [#allocation3], %s141
        %s143 = sand.u32 %s49, 1
        %s144 = smul.addr %s143, 64
        %s145 = scalar_lea.vmem [#allocation2], %s144
        // Predicated region
        $region25: #{tpu_custom_call.1} parent=23 // pred_check
          %p146 = pneg %p62
        $region26: #{tpu_custom_call.1} parent=23 // pred_check_branch
          %148 = sbr.rel (%p146) target = $region28
        $region27: #{tpu_custom_call.1} parent=23 // pred_region
          %149 = dma.done %s142, 1024
        $region28: #{tpu_custom_call.1} parent=23 // pred_fallthru
          _
        %s150 = sand.u32 %s49, 1
        %s151 = scalar_lea.sflag [#allocation3], %s150
        %s152 = sand.u32 %s49, 1
        %s153 = smul.addr %s152, 64
        %s154 = scalar_lea.vmem [#allocation2], %s153
        %p155 = pneg %p62
        %p156 = pneg %p59
        %p157 = pneg %p92
        %p158 = pneg %p89
        %s159 = sand.u32 %s79, 1
        %s160 = scalar_lea.sflag [#allocation4], %s159
        %s161 = sand.u32 %s79, 1
        %s162 = smul.addr %s161, 64
        %s163 = scalar_lea.vmem [#allocation5], %s162
        %v164 = vld [vmem:[%s145] sm:$0xff]
        %v165 = vld [vmem:[%s145 + $0x8] sm:$0xff]
        %v166 = vld [vmem:[%s145 + $0x10] sm:$0xff]
        %v167 = vld [vmem:[%s145 + $0x18] sm:$0xff]
        %v168 = vld [vmem:[%s145 + $0x20] sm:$0xff]
        %v169 = vld [vmem:[%s145 + $0x28] sm:$0xff]
        %v170 = vld [vmem:[%s145 + $0x30] sm:$0xff]
        %v171 = vld [vmem:[%s145 + $0x38] sm:$0xff]
        %vm172 = vcmask 64512
        %173 = vst.msk [vmem:[%s163] sm:$0xff] %vm172, %v164
        %174 = vst.msk [vmem:[%s163 + $0x8] sm:$0xff] %vm172, %v165
        %175 = vst.msk [vmem:[%s163 + $0x10] sm:$0xff] %vm172, %v166
        %176 = vst.msk [vmem:[%s163 + $0x18] sm:$0xff] %vm172, %v167
        %177 = vst.msk [vmem:[%s163 + $0x20] sm:$0xff] %vm172, %v168
        %178 = vst.msk [vmem:[%s163 + $0x28] sm:$0xff] %vm172, %v169
        %179 = vst.msk [vmem:[%s163 + $0x30] sm:$0xff] %vm172, %v170
        %180 = vst.msk [vmem:[%s163 + $0x38] sm:$0xff] %vm172, %v171
        %s181 = sand.u32 %s79, 1
        %s182 = scalar_lea.sflag [#allocation4], %s181
        %s183 = sand.u32 %s79, 1
        %s184 = smul.addr %s183, 64
        %s185 = scalar_lea.vmem [#allocation5], %s184
        // Predicated region
        $region29: #{tpu_custom_call.1} parent=23 // pred_check
          %p186 = pneg %p89
        $region30: #{tpu_custom_call.1} parent=23 // pred_check_branch
          %188 = sbr.rel (%p186) target = $region32
        $region31: #{tpu_custom_call.1} parent=23 // pred_region
          %s190 = ssub.s32 1024, 1024
          %191 = vsyncadd %s182, %s190
          %s192 = smul.addr %s24, 8
          %s193 = sadd.s32 %s25, %s192
          %s194 = smul.addr %s23, 16
          %s195 = sadd.s32 %s193, %s194
          %s196 = smul.addr %s195, 128
          %s197 = scalar_lea.hbm %s1, %s196
          %s198 = sshll.u32 %s185, 4
          %s199 = int_to_ptr.vmem [resolvable:$true] %s198
          %204 = dma.vmem_to_hbm [thread:$0]  %s199, 1024, %s197, %s182, 128, 128, 8
        $region32: #{tpu_custom_call.1} parent=23 // pred_fallthru
          _
      $region24: #{tpu_custom_call.1} parent=5 // pred_fallthru
        _
      %p205 = scmp.le.s32.totalorder 2, %s13
      // Predicated region
      $region33: #{tpu_custom_call.1} parent=5 // pred_check
        %p206 = pneg %p205
      $region34: #{tpu_custom_call.1} parent=5 // pred_check_branch
        %208 = sbr.rel (%p206) target = $region36
      $region35: #{tpu_custom_call.1} parent=5 // pred_region
        %s209 = ssub.s32 %s13, 2
        // Predicated region
        $region37: #{tpu_custom_call.1} parent=35 // pred_check
          %p210 = pneg %p95
        $region38: #{tpu_custom_call.1} parent=35 // pred_check_branch
          %212 = sbr.rel (%p210) target = $region40
        $region39: #{tpu_custom_call.1} parent=35 // pred_region
          %s213 = sand.u32 %s80, 1
          %s214 = scalar_lea.sflag [#allocation4], %s213
          %s215 = sand.u32 %s80, 1
          %s216 = smul.addr %s215, 64
          %s217 = scalar_lea.vmem [#allocation5], %s216
          %218 = dma.done %s214, 1024
        $region40: #{tpu_custom_call.1} parent=35 // pred_fallthru
          _
      $region36: #{tpu_custom_call.1} parent=5 // pred_fallthru
        _
    $region6: #{tpu_custom_call.1} parent=1 // loop_footer
      %s17 = sadd.s32 1, %s13
    $region7: #{tpu_custom_call.1} parent=1 // loop_footer_branch
      %12 = sbr.rel target = $region3
    $region8: #{tpu_custom_call.1} parent=1 // loop_exit
      _
    %219 = vsyncpa [#allocation3], 1
    %s220 = scalar_lea.sflag [#allocation3], 1
    %221 = vsyncpa %s220, 1
    %222 = vsyncpa [#allocation4], 1
    %s223 = scalar_lea.sflag [#allocation4], 1
    %224 = vsyncpa %s223, 1

</llo_original>
